<compile_context>
chip_gen: v5e
topology: v5e:2x2
jax: 0.10.0
libtpu: 0.0.40
codegen_flags: <defaults>
</compile_context>

<pallas_src>
import math

import jax
import jax.numpy as jnp
from jax.experimental import pallas as pl
from jax.experimental.pallas import tpu as pltpu


def _cdiv(a, b):
    return (a + b - 1) // b


# ---------------------------------------------------------------------------
# Kernels. Weight tile is (bk, bn) in transposed (d_model, d_out) layout, so the
# contraction is a plain row-major x-tile @ w-tile on the MXU (no XLU transpose).
# ---------------------------------------------------------------------------
def _mm_bias_kernel(x_ref, w_ref, b_ref, o_ref):
    acc = jnp.dot(x_ref[...], w_ref[...], preferred_element_type=jnp.float32)
    o_ref[...] = (acc + b_ref[...]).astype(o_ref.dtype)


def _mm_kernel(x_ref, w_ref, o_ref):
    acc = jnp.dot(x_ref[...], w_ref[...], preferred_element_type=jnp.float32)
    o_ref[...] = acc.astype(o_ref.dtype)


def _mm_ktiled_f32_bias_kernel(x_ref, w_ref, b_ref, o_ref):
    # f32 output block is resident across the k axis -> accumulate in place.
    k = pl.program_id(2)
    acc = jnp.dot(x_ref[...], w_ref[...], preferred_element_type=jnp.float32)

    @pl.when(k == 0)
    def _init():
        o_ref[...] = acc + b_ref[...]

    @pl.when(k > 0)
    def _acc():
        o_ref[...] += acc


def _mm_ktiled_f32_kernel(x_ref, w_ref, o_ref):
    k = pl.program_id(2)
    acc = jnp.dot(x_ref[...], w_ref[...], preferred_element_type=jnp.float32)

    @pl.when(k == 0)
    def _init():
        o_ref[...] = acc

    @pl.when(k > 0)
    def _acc():
        o_ref[...] += acc


def _mm_ktiled_acc_bias_kernel(x_ref, w_ref, b_ref, o_ref, acc_ref):
    # Non-f32 output: keep an f32 VMEM accumulator, cast once at the end.
    k = pl.program_id(2)

    @pl.when(k == 0)
    def _init():
        acc_ref[...] = jnp.zeros_like(acc_ref)

    acc_ref[...] += jnp.dot(x_ref[...], w_ref[...], preferred_element_type=jnp.float32)

    @pl.when(k == pl.num_programs(2) - 1)
    def _finish():
        o_ref[...] = (acc_ref[...] + b_ref[...]).astype(o_ref.dtype)


def _mm_ktiled_acc_kernel(x_ref, w_ref, o_ref, acc_ref):
    k = pl.program_id(2)

    @pl.when(k == 0)
    def _init():
        acc_ref[...] = jnp.zeros_like(acc_ref)

    acc_ref[...] += jnp.dot(x_ref[...], w_ref[...], preferred_element_type=jnp.float32)

    @pl.when(k == pl.num_programs(2) - 1)
    def _finish():
        o_ref[...] = acc_ref[...].astype(o_ref.dtype)


# ---------------------------------------------------------------------------
# Wrapper.
# ---------------------------------------------------------------------------
def prepare_for_mha(x, weight, bias, heads, d_k, *,
                    tm=512, tn=512, tk=1024,
                    compute_dtype=None, max_single_k=None):
    """PrepareForMultiHeadAttention forward.

    x:      (..., d_model)
    weight: (heads*d_k, d_model)   -- PyTorch nn.Linear layout
    bias:   (heads*d_k,) or None
    Returns (..., heads, d_k) in x's original dtype.
    """
    *lead, d_model = x.shape
    d_out = heads * d_k
    assert weight.shape == (d_out, d_model)
    out_dtype = x.dtype

    if compute_dtype is not None:                       # optional bf16 compute path
        x = x.astype(compute_dtype)
        weight = weight.astype(compute_dtype)

    M = int(math.prod(lead)) if lead else 1
    x2d = x.reshape(M, d_model)
    # One wrapper-side transpose (small vs activation traffic); kernel then does
    # a plain (bm,bk)@(bk,bn) MXU matmul with no per-tile XLU transpose.
    wT = weight.T                                       # (d_model, d_out)
    has_bias = bias is not None

    in_itemsize = jnp.dtype(x2d.dtype).itemsize
    out_itemsize = jnp.dtype(out_dtype).itemsize

    # ---- block sizes -------------------------------------------------------
    if M > tm:
        assert tm % 8 == 0
        bm = tm
    else:
        bm = M                                          # full extent: always legal
    if d_out > tn:
        assert tn % 128 == 0
        bn = tn                                         # lane-dense output tiles
    else:
        bn = d_out

    # Single-K (no accumulator) path for all common d_model.
    if max_single_k is None:
        max_single_k = max(tk, 8192 // in_itemsize)     # 2048 f32 / 4096 bf16
    k_tiled = d_model > max_single_k

    if not k_tiled:
        bk, Kp = d_model, d_model
    else:
        assert tk % 128 == 0
        # Prefer a 128-aligned bk that divides d_model -> no padding of x
        # (padding x would cost a full extra HBM pass over the activations).
        bk = 0
        for c in range(tk // 128, 0, -1):
            if d_model % (c * 128) == 0:
                bk = c * 128
                break
        if bk:
            Kp = d_model
        else:                                           # rare fallback: zero-pad K
            bk = tk
            Kp = _cdiv(d_model, tk) * tk
            x2d = jnp.pad(x2d, ((0, 0), (0, Kp - d_model)))
            wT = jnp.pad(wT, ((0, Kp - d_model), (0, 0)))

    m_grid = _cdiv(M, bm)
    n_grid = _cdiv(d_out, bn)
    k_grid = Kp // bk

    args = [x2d, wT]
    if has_bias:
        args.append(bias.astype(jnp.float32).reshape(1, d_out))

    use_scratch = k_tiled and out_dtype != jnp.float32

    if not k_tiled:
        grid = (m_grid, n_grid)
        in_specs = [
            pl.BlockSpec((bm, bk), lambda i, j: (i, 0)),
            pl.BlockSpec((bk, bn), lambda i, j: (0, j)),
        ]
        if has_bias:
            in_specs.append(pl.BlockSpec((1, bn), lambda i, j: (0, j)))
        out_specs = pl.BlockSpec((bm, bn), lambda i, j: (i, j))
        scratch_shapes = []
        kernel = _mm_bias_kernel if has_bias else _mm_kernel
        dim_sem = ("parallel", "parallel")
    else:
        grid = (m_grid, n_grid, k_grid)
        in_specs = [
            pl.BlockSpec((bm, bk), lambda i, j, k: (i, k)),
            pl.BlockSpec((bk, bn), lambda i, j, k: (k, j)),
        ]
        if has_bias:
            in_specs.append(pl.BlockSpec((1, bn), lambda i, j, k: (0, j)))
        out_specs = pl.BlockSpec((bm, bn), lambda i, j, k: (i, j))
        if use_scratch:
            scratch_shapes = [pltpu.VMEM((bm, bn), jnp.float32)]
            kernel = _mm_ktiled_acc_bias_kernel if has_bias else _mm_ktiled_acc_kernel
        else:
            scratch_shapes = []
            kernel = _mm_ktiled_f32_bias_kernel if has_bias else _mm_ktiled_f32_kernel
        dim_sem = ("parallel", "parallel", "arbitrary")

    # ---- VMEM limit sized from the actual (double-buffered) block footprint --
    tile_bytes = 2 * (bm * bk * in_itemsize + bk * bn * in_itemsize
                      + bm * bn * out_itemsize)
    if has_bias:
        tile_bytes += 2 * bn * 4
    if use_scratch:
        tile_bytes += bm * bn * 4
    vmem_limit = min(max(tile_bytes + tile_bytes // 4 + (2 << 20), 32 << 20), 56 << 20)

    # ---- cost estimate counting revisited HBM traffic ------------------------
    bytes_accessed = (M * Kp * in_itemsize * n_grid         # x re-read per N tile
                      + Kp * d_out * in_itemsize * m_grid   # W re-read per M tile
                      + M * d_out * out_itemsize)           # output written once
    if has_bias:
        bytes_accessed += d_out * 4 * m_grid
    cost = pl.CostEstimate(flops=2 * M * Kp * d_out, transcendentals=0,
                           bytes_accessed=bytes_accessed)

    out2d = pl.pallas_call(
        kernel,
        out_shape=jax.ShapeDtypeStruct((M, d_out), out_dtype),
        grid_spec=pltpu.PrefetchScalarGridSpec(
            num_scalar_prefetch=0,
            grid=grid,
            in_specs=in_specs,
            out_specs=out_specs,
            scratch_shapes=scratch_shapes,
        ),
        compiler_params=pltpu.CompilerParams(
            dimension_semantics=dim_sem,
            vmem_limit_bytes=vmem_limit,
        ),
        cost_estimate=cost,
    )(*args)

    return out2d.reshape(*lead, heads, d_k)


# ---------------------------------------------------------------------------
# Demo / correctness checks.
# ---------------------------------------------------------------------------
if __name__ == "__main__":
    key = jax.random.PRNGKey(0)

    def ref_forward(x, weight, bias, heads, d_k):
        d_model = x.shape[-1]
        y = jnp.einsum("md,nd->mn",
                       x.reshape(-1, d_model).astype(jnp.float32),
                       weight.astype(jnp.float32),
                       precision=jax.lax.Precision.HIGHEST)
        if bias is not None:
            y = y + bias.astype(jnp.float32)
        return y.reshape(*x.shape[:-1], heads, d_k)

    def check(out, ref, atol, rtol):
        assert jnp.allclose(out.astype(jnp.float32), ref, atol=atol, rtol=rtol), \
            float(jnp.max(jnp.abs(out.astype(jnp.float32) - ref)))

    # --- 1) module config at small shapes: bias, single-K, full-extent blocks ---
    d_model, heads, d_k = 32, 4, 8
    d_out = heads * d_k
    bound = 1.0 / math.sqrt(d_model)
    k1, k2, k3, key = jax.random.split(key, 4)
    x = jax.random.normal(k1, (2, 8, d_model), dtype=jnp.float32)
    weight = jax.random.uniform(k2, (d_out, d_model), jnp.float32, -bound, bound)
    bias = jax.random.uniform(k3, (d_out,), jnp.float32, -bound, bound)

    out = jax.block_until_ready(prepare_for_mha(x, weight, bias, heads, d_k))
    assert out.shape == (2, 8, heads, d_k)
    check(out, ref_forward(x, weight, bias, heads, d_k), 2e-4, 2e-4)

    # --- 2) same shapes, no bias (bias operand fully skipped) ---
    out_nb = jax.block_until_ready(prepare_for_mha(x, weight, None, heads, d_k))
    check(out_nb, ref_forward(x, weight, None, heads, d_k), 2e-4, 2e-4)

    # --- 3) ragged M + tiled N, single-K path (cdiv grid, masked edge writes) ---
    heads2, d_k2, d_model2 = 8, 32, 256
    d_out2 = heads2 * d_k2
    bound2 = 1.0 / math.sqrt(d_model2)
    k1, k2, k3, key = jax.random.split(key, 4)
    x2 = jax.random.normal(k1, (12, 3, d_model2), dtype=jnp.float32)   # M = 36
    w2 = jax.random.uniform(k2, (d_out2, d_model2), jnp.float32, -bound2, bound2)
    b2 = jax.random.uniform(k3, (d_out2,), jnp.float32, -bound2, bound2)

    out2 = jax.block_until_ready(
        prepare_for_mha(x2, w2, b2, heads2, d_k2, tm=16, tn=128))
    assert out2.shape == (12, 3, heads2, d_k2)
    check(out2, ref_forward(x2, w2, b2, heads2, d_k2), 2e-4, 2e-4)

    # --- 4) K-tiled path, f32 output -> accumulate directly into o_ref ---
    d_model3 = 384
    bound3 = 1.0 / math.sqrt(d_model3)
    k1, k2, k3, key = jax.random.split(key, 4)
    x3 = jax.random.normal(k1, (12, 3, d_model3), dtype=jnp.float32)
    w3 = jax.random.uniform(k2, (d_out2, d_model3), jnp.float32, -bound3, bound3)
    b3 = jax.random.uniform(k3, (d_out2,), jnp.float32, -bound3, bound3)

    out3 = jax.block_until_ready(
        prepare_for_mha(x3, w3, b3, heads2, d_k2,
                        tm=16, tn=128, tk=128, max_single_k=128))
    check(out3, ref_forward(x3, w3, b3, heads2, d_k2), 5e-4, 5e-4)

    # --- 5) K-tiled path, bf16 output -> f32 VMEM accumulator scratch ---
    x3b = x3.astype(jnp.bfloat16)
    w3b = w3.astype(jnp.bfloat16)
    out3b = jax.block_until_ready(
        prepare_for_mha(x3b, w3b, b3, heads2, d_k2,
                        tm=16, tn=128, tk=128, max_single_k=128))
    assert out3b.dtype == jnp.bfloat16
    check(out3b, ref_forward(x3b, w3b, b3, heads2, d_k2), 3e-2, 3e-2)

    print("KERNEL_OK")
</pallas_src>

<mosaic_0001>
module attributes {stable_mosaic.version = 11 : i64} {
  func.func @_mm_bias_kernel(%arg0: i32, %arg1: i32, %arg2: memref<16x32xf32, #tpu.memory_space<vmem>>, %arg3: memref<32x32xf32, #tpu.memory_space<vmem>>, %arg4: memref<1x32xf32, #tpu.memory_space<vmem>>, %arg5: memref<16x32xf32, #tpu.memory_space<vmem>>) attributes {dimension_semantics = [#tpu.dimension_semantics<parallel>, #tpu.dimension_semantics<parallel>], iteration_bounds = array<i64: 1, 1>, scalar_prefetch = 0 : i64, scratch_operands = 0 : i64, tpu.core_type = #tpu.core_type<tc>, window_params = [{transform_indices = @transform_0, window_bounds = array<i64: 16, 32>}, {transform_indices = @transform_1, window_bounds = array<i64: 32, 32>}, {transform_indices = @transform_2, window_bounds = array<i64: 1, 32>}, {transform_indices = @transform_3, window_bounds = array<i64: 16, 32>}]} {
    %c0 = arith.constant 0 : index
    %c0_0 = arith.constant 0 : index
    %0 = vector.load %arg2[%c0, %c0_0] : memref<16x32xf32, #tpu.memory_space<vmem>>, vector<16x32xf32>
    %c0_1 = arith.constant 0 : index
    %c0_2 = arith.constant 0 : index
    %1 = vector.load %arg3[%c0_1, %c0_2] : memref<32x32xf32, #tpu.memory_space<vmem>>, vector<32x32xf32>
    %cst = arith.constant dense<0.000000e+00> : vector<16x32xf32>
    %2 = tpu.matmul %0, %1, %cst {dimension_numbers = #tpu.dot_dimension_numbers<[1], [0], [0], [1], [0, 0, 1, 1], [], []>} : vector<16x32xf32>, vector<32x32xf32>, vector<16x32xf32> -> vector<16x32xf32>
    %c0_3 = arith.constant 0 : index
    %c0_4 = arith.constant 0 : index
    %3 = vector.load %arg4[%c0_3, %c0_4] : memref<1x32xf32, #tpu.memory_space<vmem>>, vector<1x32xf32>
    %4 = vector.broadcast %3 : vector<1x32xf32> to vector<16x32xf32>
    %5 = arith.addf %2, %4 : vector<16x32xf32>
    %c0_5 = arith.constant 0 : index
    %c0_6 = arith.constant 0 : index
    %6 = vector.load %arg5[%c0_5, %c0_6] : memref<16x32xf32, #tpu.memory_space<vmem>>, vector<16x32xf32>
    tpu.vector_store %arg5[%c0_5, %c0_6], %5 {strides = array<i32>} : memref<16x32xf32, #tpu.memory_space<vmem>>, vector<16x32xf32>,
    return
  }
  func.func @transform_0(%arg0: i32, %arg1: i32) -> (i32, i32) {
    %c0_i32 = arith.constant 0 : i32
    %c0_i32_0 = arith.constant 0 : i32
    return %arg0, %c0_i32 : i32, i32
  }
  func.func @transform_1(%arg0: i32, %arg1: i32) -> (i32, i32) {
    %c0_i32 = arith.constant 0 : i32
    %c0_i32_0 = arith.constant 0 : i32
    return %c0_i32, %arg1 : i32, i32
  }
  func.func @transform_2(%arg0: i32, %arg1: i32) -> (i32, i32) {
    %c0_i32 = arith.constant 0 : i32
    %c0_i32_0 = arith.constant 0 : i32
    return %c0_i32, %arg1 : i32, i32
  }
  func.func @transform_3(%arg0: i32, %arg1: i32) -> (i32, i32) {
    %c0_i32 = arith.constant 0 : i32
    return %arg0, %arg1 : i32, i32
  }
}

</mosaic_0001>

<llo_original>
// kernel: tpu_custom_call.1
$region0: #{tpu_custom_call.1}
  #allocation0 [shape = 'u32[]', space=smem, size = 0x4, offset = 0x4, fixed_abs, tag = 'smem constant byte address 0x4 - core index']
  #allocation1 [shape = 'u32[72,128]{1,0:T(1,128)}', space=vmem, size = 0x9000, scoped, tag = 'internal scratch']
  %s0 = inlined_call_operand.hbm [shape: f32[16,32], index: 0, kind: input, shape index: {}]
  %s1 = inlined_call_operand.hbm [shape: f32[32,32], index: 1, kind: input, shape index: {}]
  %s2 = inlined_call_operand.vmem [shape: f32[1,32], index: 2, kind: input, shape index: {}]
  %s3 = inlined_call_operand.hbm [shape: f32[16,32], index: 3, kind: output, shape index: {}]
  %s4 = sld [smem:[#allocation0]]
  $region30: #{tpu_custom_call.1} parent=0
    _
  %s6 = ssub.s32 1, %s4
  %s7 = scalar_select 0, %s6, %s4
  $region1: #{tpu_custom_call.1} parent=0
    #allocation2 [shape = 'u8[8192]{0}', space=vmem, size = 0x2000, scoped, tag = 'input window, operand 0, single buffered']
    #allocation3 [shape = 's32[1]{0}', space=sflag, size = 0x4, scoped, tag = 'scoped memory for tpu_custom_call.1']
    #allocation4 [shape = 's32[1]{0}', space=sflag, size = 0x4, scoped, tag = 'scoped memory for tpu_custom_call.1']
    #allocation5 [shape = 'u8[16384]{0}', space=vmem, size = 0x4000, scoped, tag = 'input window, operand 1, single buffered']
    #allocation6 [shape = 's32[1]{0}', space=sflag, size = 0x4, scoped, tag = 'scoped memory for tpu_custom_call.1']
    #allocation7 [shape = 'u8[8192]{0}', space=vmem, size = 0x2000, scoped, tag = 'output window, operand 0, single buffered']
    %8 = vsyncpa [#allocation3], 0
    %9 = vsyncpa [#allocation6], 0
    %10 = vsyncpa [#allocation4], 0
    // Predicated region
    $region2: #{tpu_custom_call.1} parent=1 // pred_check
      _
    $region3: #{tpu_custom_call.1} parent=1 // pred_check_branch
      %12 = sbr.rel (0) target = $region5
    $region4: #{tpu_custom_call.1} parent=1 // pred_region
      %14 = vsyncadd [#allocation3], 0
      %s15 = sshll.u32 %s0, 4
      %s16 = int_to_ptr.hbm [resolvable:$true] %s15
      %s17 = sshll.u32 [#allocation2], 4
      %s18 = int_to_ptr.vmem [resolvable:$true] %s17
      %23 = dma.hbm_to_vmem [thread:$0]  %s16, 256, %s18, [#allocation3], 128, 128, 8
    $region5: #{tpu_custom_call.1} parent=1 // pred_fallthru
      _
    // Predicated region
    $region6: #{tpu_custom_call.1} parent=1 // pred_check
      _
    $region7: #{tpu_custom_call.1} parent=1 // pred_check_branch
      %25 = sbr.rel (0) target = $region9
    $region8: #{tpu_custom_call.1} parent=1 // pred_region
      %27 = vsyncadd [#allocation6], 0
      %s28 = sshll.u32 %s1, 4
      %s29 = int_to_ptr.hbm [resolvable:$true] %s28
      %s30 = sshll.u32 [#allocation5], 4
      %s31 = int_to_ptr.vmem [resolvable:$true] %s30
      %36 = dma.hbm_to_vmem [thread:$0]  %s29, 512, %s31, [#allocation6], 128, 128, 8
    $region9: #{tpu_custom_call.1} parent=1 // pred_fallthru
      _
    // Predicated region
    $region10: #{tpu_custom_call.1} parent=1 // pred_check
      _
    $region11: #{tpu_custom_call.1} parent=1 // pred_check_branch
      %38 = sbr.rel (0) target = $region13
    $region12: #{tpu_custom_call.1} parent=1 // pred_region
      _
    $region13: #{tpu_custom_call.1} parent=1 // pred_fallthru
      _
    // Predicated region
    $region14: #{tpu_custom_call.1} parent=1 // pred_check
      _
    $region15: #{tpu_custom_call.1} parent=1 // pred_check_branch
      %40 = sbr.rel (0) target = $region17
    $region16: #{tpu_custom_call.1} parent=1 // pred_region
      %42 = dma.done [#allocation3], 256
    $region17: #{tpu_custom_call.1} parent=1 // pred_fallthru
      _
    // Predicated region
    $region18: #{tpu_custom_call.1} parent=1 // pred_check
      _
    $region19: #{tpu_custom_call.1} parent=1 // pred_check_branch
      %44 = sbr.rel (0) target = $region21
    $region20: #{tpu_custom_call.1} parent=1 // pred_region
      %46 = dma.done [#allocation6], 512
    $region21: #{tpu_custom_call.1} parent=1 // pred_fallthru
      _
    %v47 = vld [vmem:[#allocation2] sm:$0xff]
    %v48 = vld [vmem:[#allocation2 + $0x8] sm:$0xff]
    %v49 = vld [vmem:[#allocation5] sm:$0xff]
    %v50 = vld [vmem:[#allocation5 + $0x8] sm:$0xff]
    %v51 = vld [vmem:[#allocation5 + $0x10] sm:$0xff]
    %v52 = vld [vmem:[#allocation5 + $0x18] sm:$0xff]
    %v53 = vld [vmem:[%s2] sm:$0x1]
    %v55 = vperm.slane %v53, 0
    %vm57 = vcmask 261120
    %v59 = vsel %vm57, %v47, 0
    %v62 = vsel %vm57, %v48, 0
    %64 = vmatpush.msra.mxu0 0.0
    %65 = vmatpush.msra.mxu0 0.0
    %66 = vmatpush.msra.mxu0 0.0
    %67 = vmatpush.msra.mxu0 0.0
    %68 = vmatpush.msra.mxu0 0.0
    %69 = vmatpush.msra.mxu0 0.0
    %70 = vmatpush.msra.mxu0 0.0
    %71 = vmatpush.msra.mxu0 0.0
    %72 = vmatpush.msra.mxu0 0.0
    %73 = vmatpush.msra.mxu0 0.0
    %74 = vmatpush.msra.mxu0 0.0
    %75 = vmatpush.msra.mxu0 0.0
    %76 = vmatpush.msra.mxu0 %v52
    %77 = vmatpush.msra.mxu0 %v51
    %78 = vmatpush.msra.mxu0 %v50
    %79 = vmatpush.msra.mxu0 %v49
    %80 = vmatmul.f32.gmra.mxu0 %v59
    %v81 = vpop.f32.mrf.mxu0
    %v82 = vadd.f32 %v55, %v81
    %83 = vmatmul.f32.gmra.mxu0 %v62
    %v84 = vpop.f32.mrf.mxu0
    %v85 = vadd.f32 %v55, %v84
    %86 = vdwg.mxu0
    %87 = vst.msk [vmem:[#allocation7] sm:$0xff] %vm57, %v82
    %88 = vst.msk [vmem:[#allocation7 + $0x8] sm:$0xff] %vm57, %v85
    // Predicated region
    $region22: #{tpu_custom_call.1} parent=1 // pred_check
      _
    $region23: #{tpu_custom_call.1} parent=1 // pred_check_branch
      %90 = sbr.rel (0) target = $region25
    $region24: #{tpu_custom_call.1} parent=1 // pred_region
      %92 = vsyncadd [#allocation4], 0
      %s93 = sshll.u32 [#allocation7], 4
      %s94 = int_to_ptr.vmem [resolvable:$true] %s93
      %s95 = sshll.u32 %s3, 4
      %s96 = int_to_ptr.hbm [resolvable:$true] %s95
      %101 = dma.vmem_to_hbm [thread:$0]  %s94, 256, %s96, [#allocation4], 128, 128, 8
    $region25: #{tpu_custom_call.1} parent=1 // pred_fallthru
      _
    // Predicated region
    $region26: #{tpu_custom_call.1} parent=1 // pred_check
      _
    $region27: #{tpu_custom_call.1} parent=1 // pred_check_branch
      %103 = sbr.rel (0) target = $region29
    $region28: #{tpu_custom_call.1} parent=1 // pred_region
      %105 = dma.done [#allocation4], 256
    $region29: #{tpu_custom_call.1} parent=1 // pred_fallthru
      _
    %106 = vsyncpa [#allocation3], 1
    %107 = vsyncpa [#allocation6], 1
    %108 = vsyncpa [#allocation4], 1

</llo_original>
